<compile_context>
chip_gen: v6e
topology: v6e:2x2x1
jax: 0.10.0
libtpu: 0.0.40
codegen_flags: <defaults>
</compile_context>

<pallas_src>
import functools
import math

import jax
import jax.numpy as jnp
from jax import lax
from jax.experimental import pallas as pl
from jax.experimental.pallas import tpu as pltpu


_MASK_VALUE = -1e9                    # matches torch masked_fill(-1000000000.0)


def _default_vmem_limit():
    """Per-generation scoped VMEM: ~48 MiB on v7x (64 MiB phys), ~96 MiB on
    v5e/v6e (128 MiB phys)."""
    cap = 128 * 1024 * 1024
    try:
        cap = int(pltpu.get_tpu_info().vmem_capacity_bytes)
    except Exception:                 # interpret mode / older jax: assume 128 MiB
        pass
    return min((cap * 3) // 4, 112 * 1024 * 1024)


def _const_spec(block_shape, index_map):
    """Constant-index block (weights / biases): request single buffering so the
    resident (H,H) weight does not get double-buffered (halves its VMEM)."""
    try:
        return pl.BlockSpec(block_shape, index_map, pipeline_mode=pl.Buffered(1))
    except (TypeError, AttributeError):     # older jax without pipeline_mode
        return pl.BlockSpec(block_shape, index_map)


def _pick_tile(dim, target):
    """Largest tile <= target that divides `dim` and is a multiple of 8."""
    # TODO(synk): pad awkward sequence lengths instead of falling back to `dim`.
    if dim <= target:
        return dim
    for t in range(target, 7, -1):
        if t % 8 == 0 and dim % t == 0:
            return t
    return dim


def _pick_col_tile(h_in, h_out, itemsize, vmem_limit_bytes):
    """Shrink the stage-1 weight block until its double-buffered footprint fits
    ~1/4 of the VMEM budget (matters for large H under v7x's 64 MiB VMEM)."""
    col = h_out
    budget = max(vmem_limit_bytes // 4, 1)
    while 2 * h_in * col * itemsize > budget and col % 256 == 0:
        col //= 2
    return col


# ---------------------------------------------------------------------------
# Stage 1: tiled linear projection  y = x @ W + b   (W already (in, out)).
# ---------------------------------------------------------------------------
def _linear_kernel(x_ref, w_ref, b_ref, o_ref):
    x = x_ref[...].astype(w_ref.dtype)                 # bf16 MXU inputs
    y = jnp.dot(x, w_ref[...], preferred_element_type=jnp.float32)
    o_ref[...] = (y + b_ref[...]).astype(o_ref.dtype)  # lane-dense store


def _linear(x, w, bias, *, row_tile, col_tile, vmem_limit_bytes):
    B, S, h_in = x.shape
    h_out = w.shape[1]
    assert S % row_tile == 0 and h_out % col_tile == 0
    n_cols = h_out // col_tile
    if n_cols == 1:
        # Constant-index weight/bias blocks: loaded once, single-buffered.
        w_spec = _const_spec((h_in, col_tile), lambda b, i, j: (0, 0))
        b_spec = _const_spec((1, col_tile), lambda b, i, j: (0, 0))
    else:
        # h_out tiled (v7x large-H path): weight block varies with j.
        w_spec = pl.BlockSpec((h_in, col_tile), lambda b, i, j: (0, j))
        b_spec = pl.BlockSpec((1, col_tile), lambda b, i, j: (0, j))
    return pl.pallas_call(
        _linear_kernel,
        out_shape=jax.ShapeDtypeStruct((B, S, h_out), w.dtype),
        grid=(B, S // row_tile, n_cols),
        in_specs=[
            pl.BlockSpec((None, row_tile, h_in), lambda b, i, j: (b, i, 0)),
            w_spec,
            b_spec,
        ],
        out_specs=pl.BlockSpec((None, row_tile, col_tile),
                               lambda b, i, j: (b, i, j)),
        compiler_params=pltpu.CompilerParams(
            dimension_semantics=("parallel", "parallel", "parallel"),
            vmem_limit_bytes=vmem_limit_bytes),
    )(x, w, bias)


# ---------------------------------------------------------------------------
# Stage 2: fused Q-projection + flash attention + merge projection.
# ---------------------------------------------------------------------------
def _flash_mha_kernel(q_ref, kp_ref, vp_ref, bias_ref, wq_ref, bq_ref,
                      wm_ref, bm_ref, o_ref,
                      m_ref, l_ref, acc_ref, qp_ref, cat_ref,
                      *, n_head, d_k, approx_recip):
    kv = pl.program_id(2)

    @pl.when(kv == 0)
    def _init():
        # Project this Q tile exactly once per (batch, q-tile).  The attention
        # scale 1/sqrt(d_k) is already folded into W_q / b_q on the host.
        xq = q_ref[...].astype(wq_ref.dtype)
        qp = jnp.dot(xq, wq_ref[...], preferred_element_type=jnp.float32)
        qp_ref[...] = (qp + bq_ref[...]).astype(qp_ref.dtype)
        m_ref[...] = jnp.full(m_ref.shape, -jnp.inf, m_ref.dtype)
        l_ref[...] = jnp.zeros(l_ref.shape, l_ref.dtype)
        acc_ref[...] = jnp.zeros(acc_ref.shape, acc_ref.dtype)

    bias = bias_ref[...]                 # (1, tk) additive bias: 0 / -1e9 (f32)
    mxu_dtype = vp_ref.dtype

    # n_head is small & static -> static unroll; per-head state lives in
    # scratch refs, heads are read as static slices of the projected tiles.
    for h in range(n_head):
        sl = pl.ds(h * d_k, d_k)
        qh = qp_ref[:, sl]               # (tq, d_k)   pre-scaled
        kh = kp_ref[:, sl]               # (tk, d_k)
        vh = vp_ref[:, sl]               # (tk, d_k)

        # q @ k^T without explicit transpose: contract last dims on the MXU.
        s = lax.dot_general(qh, kh, (((1,), (1,)), ((), ())),
                            preferred_element_type=jnp.float32)
        s = s + bias                     # masked keys -> -1e9 (f32 math)

        m_prev = m_ref[h]                                        # (tq, 1)
        m_new = jnp.maximum(m_prev, jnp.max(s, axis=-1, keepdims=True))
        alpha = jnp.exp(m_prev - m_new)
        p = jnp.exp(s - m_new)                                   # f32
        l_ref[h] = alpha * l_ref[h] + jnp.sum(p, axis=-1, keepdims=True)
        acc_ref[h] = alpha * acc_ref[h] + jnp.dot(
            p.astype(mxu_dtype), vh, preferred_element_type=jnp.float32)
        m_ref[h] = m_new

    @pl.when(kv == pl.num_programs(2) - 1)
    def _finalize():
        # Normalize each head into the (tq, H) concat scratch, then ONE H-wide
        # merge matmul (full MXU utilization; no per-head d_k-wide dots and no
        # running (tq, H) f32 value to spill).
        for h in range(n_head):
            inv_l = pl.reciprocal(l_ref[h], approx=approx_recip)   # EUP slot
            cat_ref[:, h * d_k:(h + 1) * d_k] = (
                acc_ref[h] * inv_l).astype(cat_ref.dtype)
        out = jnp.dot(cat_ref[...], wm_ref[...],
                      preferred_element_type=jnp.float32)
        o_ref[...] = (out + bm_ref[...]).astype(o_ref.dtype)


def multihead_attention(v, k, q, mask, params, *, n_head,
                        mxu_dtype=jnp.bfloat16, out_dtype=None,
                        q_tile=None, kv_tile=None, row_tile=None,
                        vmem_limit_bytes=None):
    """v,k,q: (B, S, H) f32; mask: (B, 1, 1, Sk) bool (True == masked key)."""
    B, Sq, H = q.shape
    Sk = k.shape[1]
    assert k.shape == (B, Sk, H) and v.shape == (B, Sk, H)
    assert H % n_head == 0
    d_k = H // n_head
    scale = 1.0 / math.sqrt(d_k)
    out_dtype = out_dtype or q.dtype    # pass bf16 here to halve output writeback
    vmem_limit_bytes = vmem_limit_bytes or _default_vmem_limit()

    # Host-side weight prep: torch (out,in) -> (in,out); fold score scale into
    # W_q / b_q; cast weights to the MXU dtype (bf16 by default).
    wq = (params["wq"].T * scale).astype(mxu_dtype)
    wk = params["wk"].T.astype(mxu_dtype)
    wv = params["wv"].T.astype(mxu_dtype)
    wm = params["wm"].T.astype(mxu_dtype)
    bq = (params["bq"] * scale).reshape(1, H).astype(jnp.float32)
    bk = params["bk"].reshape(1, H).astype(jnp.float32)
    bv = params["bv"].reshape(1, H).astype(jnp.float32)
    bm = params["bm"].reshape(1, H).astype(jnp.float32)

    # Larger default tiles: K/V HBM re-reads scale as 1/q_tile and the f32
    # accumulator RMW amortizes over kv_tile (review items 2-4).
    q_tile = q_tile or _pick_tile(Sq, 512)
    kv_tile = kv_tile or _pick_tile(Sk, 1024)
    rt_k = row_tile or _pick_tile(Sk, 256)
    assert Sq % q_tile == 0 and Sk % kv_tile == 0
    n_q, n_kv = Sq // q_tile, Sk // kv_tile
    col_tile = _pick_col_tile(H, H, jnp.dtype(mxu_dtype).itemsize,
                              vmem_limit_bytes)

    # Stage 1: K / V projections (bf16 outputs, f32 accumulation).
    kp = _linear(k, wk, bk, row_tile=rt_k, col_tile=col_tile,
                 vmem_limit_bytes=vmem_limit_bytes)
    vp = _linear(v, wv, bv, row_tile=rt_k, col_tile=col_tile,
                 vmem_limit_bytes=vmem_limit_bytes)

    # Additive key-padding bias, pre-tiled so each kv-tile block is full-dim.
    assert mask.shape == (B, 1, 1, Sk)
    bias = jnp.where(mask.reshape(B, Sk),
                     jnp.float32(_MASK_VALUE), jnp.float32(0.0))
    bias = bias.reshape(B, n_kv, 1, kv_tile)

    approx_recip = jnp.dtype(mxu_dtype) != jnp.dtype(jnp.float32)
    kernel = functools.partial(_flash_mha_kernel, n_head=n_head, d_k=d_k,
                               approx_recip=approx_recip)

    return pl.pallas_call(
        kernel,
        out_shape=jax.ShapeDtypeStruct((B, Sq, H), out_dtype),
        grid=(B, n_q, n_kv),
        in_specs=[
            pl.BlockSpec((None, q_tile, H), lambda b, i, j: (b, i, 0)),    # raw q
            pl.BlockSpec((None, kv_tile, H), lambda b, i, j: (b, j, 0)),   # kp
            pl.BlockSpec((None, kv_tile, H), lambda b, i, j: (b, j, 0)),   # vp
            pl.BlockSpec((None, None, 1, kv_tile),
                         lambda b, i, j: (b, j, 0, 0)),                    # bias
            _const_spec((H, H), lambda b, i, j: (0, 0)),                   # wq
            _const_spec((1, H), lambda b, i, j: (0, 0)),                   # bq
            _const_spec((H, H), lambda b, i, j: (0, 0)),                   # wm
            _const_spec((1, H), lambda b, i, j: (0, 0)),                   # bm
        ],
        out_specs=pl.BlockSpec((None, q_tile, H), lambda b, i, j: (b, i, 0)),
        scratch_shapes=[
            pltpu.VMEM((n_head, q_tile, 1), jnp.float32),      # running max m
            pltpu.VMEM((n_head, q_tile, 1), jnp.float32),      # running sum l
            pltpu.VMEM((n_head, q_tile, d_k), jnp.float32),    # per-head acc
            pltpu.VMEM((q_tile, H), mxu_dtype),                # projected Q tile
            pltpu.VMEM((q_tile, H), mxu_dtype),                # head-concat buffer
        ],
        compiler_params=pltpu.CompilerParams(
            dimension_semantics=("parallel", "parallel", "arbitrary"),
            vmem_limit_bytes=vmem_limit_bytes),
    )(q, kp, vp, bias, wq, bq, wm, bm)


# ---------------------------------------------------------------------------
# Pure-JAX reference (high-precision) replicating the PyTorch forward (eval).
# ---------------------------------------------------------------------------
def _reference(v, k, q, mask, params, *, n_head):
    B, Sq, H = q.shape
    d_k = H // n_head
    hp = jax.lax.Precision.HIGHEST

    def lin(x, w, b):
        return jnp.einsum("bsh,oh->bso", x, w, precision=hp) + b

    def heads(x):
        return x.reshape(B, -1, n_head, d_k).transpose(0, 2, 1, 3)

    vp = heads(lin(v, params["wv"], params["bv"]))
    kp = heads(lin(k, params["wk"], params["bk"]))
    qp = heads(lin(q, params["wq"], params["bq"]))

    scores = jnp.einsum("bhqd,bhkd->bhqk", qp, kp, precision=hp) / math.sqrt(d_k)
    scores = jnp.where(mask, _MASK_VALUE, scores)
    att = jax.nn.softmax(scores, axis=-1)
    out = jnp.einsum("bhqk,bhkd->bhqd", att, vp, precision=hp)
    out = out.transpose(0, 2, 1, 3).reshape(B, Sq, H)
    return lin(out, params["wm"], params["bm"])


if __name__ == "__main__":
    B, Sq, Sk, H, n_head = 2, 16, 16, 32, 4

    key = jax.random.PRNGKey(0)
    keys = jax.random.split(key, 12)
    bound = 1.0 / math.sqrt(H)          # PyTorch nn.Linear default init

    def w_init(kk):
        return jax.random.uniform(kk, (H, H), jnp.float32, -bound, bound)

    def b_init(kk):
        return jax.random.uniform(kk, (H,), jnp.float32, -bound, bound)

    params = {
        "wv": w_init(keys[0]), "bv": b_init(keys[1]),
        "wk": w_init(keys[2]), "bk": b_init(keys[3]),
        "wq": w_init(keys[4]), "bq": b_init(keys[5]),
        "wm": w_init(keys[6]), "bm": b_init(keys[7]),
    }

    v = jax.random.normal(keys[8], (B, Sk, H), jnp.float32)
    k = jax.random.normal(keys[9], (B, Sk, H), jnp.float32)
    q = jax.random.normal(keys[10], (B, Sq, H), jnp.float32)

    # Key-padding mask (True == masked); hits both kv tiles of batch 1.
    mask = jnp.zeros((B, 1, 1, Sk), dtype=bool)
    mask = mask.at[1, 0, 0, -5:].set(True)
    mask = mask.at[1, 0, 0, 2].set(True)
    mask = mask.at[0, 0, 0, 3].set(True)

    # Small tiles so the demo exercises the multi-tile flash path (2 q-tiles
    # and 2 kv-tiles per batch element) and the fused-Q / concat-finalize path.
    run = functools.partial(multihead_attention, n_head=n_head,
                            q_tile=8, kv_tile=8, row_tile=8)

    out = run(v, k, q, mask, params)                             # bf16 MXU path
    out_f32 = run(v, k, q, mask, params, mxu_dtype=jnp.float32)  # f32 check path
    out, out_f32 = jax.block_until_ready((out, out_f32))

    ref = _reference(v, k, q, mask, params, n_head=n_head)
    assert out.shape == (B, Sq, H)
    assert jnp.allclose(out_f32, ref, atol=1e-2, rtol=1e-2)
    assert jnp.allclose(out, ref, atol=2e-2, rtol=2e-2)
    rel = jnp.linalg.norm(out - ref) / jnp.linalg.norm(ref)
    assert rel < 2e-2, rel

    print("KERNEL_OK")
</pallas_src>

<mosaic_0001>
module attributes {stable_mosaic.version = 11 : i64} {
  func.func @_linear_kernel(%arg0: i32, %arg1: i32, %arg2: i32, %arg3: memref<1x8x32xf32, #tpu.memory_space<vmem>>, %arg4: memref<32x32xbf16, #tpu.memory_space<vmem>>, %arg5: memref<1x32xf32, #tpu.memory_space<vmem>>, %arg6: memref<1x8x32xbf16, #tpu.memory_space<vmem>>) attributes {dimension_semantics = [#tpu.dimension_semantics<parallel>, #tpu.dimension_semantics<parallel>, #tpu.dimension_semantics<parallel>], iteration_bounds = array<i64: 2, 2, 1>, scalar_prefetch = 0 : i64, scratch_operands = 0 : i64, tpu.core_type = #tpu.core_type<tc>, window_params = [{transform_indices = @transform_0, window_bounds = array<i64: 1, 8, 32>}, {pipeline_mode = #tpu.pipeline_mode<synchronous>, transform_indices = @transform_1, window_bounds = array<i64: 32, 32>}, {pipeline_mode = #tpu.pipeline_mode<synchronous>, transform_indices = @transform_2, window_bounds = array<i64: 1, 32>}, {transform_indices = @transform_3, window_bounds = array<i64: 1, 8, 32>}]} {
    %c0 = arith.constant 0 : index
    %c0_0 = arith.constant 0 : index
    %c0_1 = arith.constant 0 : index
    %0 = vector.load %arg3[%c0, %c0_0, %c0_1] : memref<1x8x32xf32, #tpu.memory_space<vmem>>, vector<1x8x32xf32>
    %1 = vector.shape_cast %0 : vector<1x8x32xf32> to vector<8x32xf32>
    %2 = arith.truncf %1 : vector<8x32xf32> to vector<8x32xbf16>
    %c0_2 = arith.constant 0 : index
    %c0_3 = arith.constant 0 : index
    %3 = vector.load %arg4[%c0_2, %c0_3] : memref<32x32xbf16, #tpu.memory_space<vmem>>, vector<32x32xbf16>
    %cst = arith.constant dense<0.000000e+00> : vector<8x32xf32>
    %4 = tpu.matmul %2, %3, %cst {dimension_numbers = #tpu.dot_dimension_numbers<[1], [0], [0], [1], [0, 0, 1, 1], [], []>} : vector<8x32xbf16>, vector<32x32xbf16>, vector<8x32xf32> -> vector<8x32xf32>
    %c0_4 = arith.constant 0 : index
    %c0_5 = arith.constant 0 : index
    %5 = vector.load %arg5[%c0_4, %c0_5] : memref<1x32xf32, #tpu.memory_space<vmem>>, vector<1x32xf32>
    %6 = vector.broadcast %5 : vector<1x32xf32> to vector<8x32xf32>
    %7 = arith.addf %4, %6 : vector<8x32xf32>
    %8 = arith.truncf %7 : vector<8x32xf32> to vector<8x32xbf16>
    %c0_6 = arith.constant 0 : index
    %c0_7 = arith.constant 0 : index
    %c0_8 = arith.constant 0 : index
    %9 = vector.load %arg6[%c0_6, %c0_7, %c0_8] : memref<1x8x32xbf16, #tpu.memory_space<vmem>>, vector<1x8x32xbf16>
    %10 = vector.shape_cast %9 : vector<1x8x32xbf16> to vector<8x32xbf16>
    %11 = vector.shape_cast %8 : vector<8x32xbf16> to vector<1x8x32xbf16>
    tpu.vector_store %arg6[%c0_6, %c0_7, %c0_8], %11 {strides = array<i32>} : memref<1x8x32xbf16, #tpu.memory_space<vmem>>, vector<1x8x32xbf16>,
    return
  }
  func.func @transform_0(%arg0: i32, %arg1: i32, %arg2: i32) -> (i32, i32, i32) {
    %c0_i32 = arith.constant 0 : i32
    %c0_i32_0 = arith.constant 0 : i32
    return %arg0, %arg1, %c0_i32 : i32, i32, i32
  }
  func.func @transform_1(%arg0: i32, %arg1: i32, %arg2: i32) -> (i32, i32) {
    %c0_i32 = arith.constant 0 : i32
    %c0_i32_0 = arith.constant 0 : i32
    %c0_i32_1 = arith.constant 0 : i32
    return %c0_i32, %c0_i32_0 : i32, i32
  }
  func.func @transform_2(%arg0: i32, %arg1: i32, %arg2: i32) -> (i32, i32) {
    %c0_i32 = arith.constant 0 : i32
    %c0_i32_0 = arith.constant 0 : i32
    %c0_i32_1 = arith.constant 0 : i32
    return %c0_i32, %c0_i32_0 : i32, i32
  }
  func.func @transform_3(%arg0: i32, %arg1: i32, %arg2: i32) -> (i32, i32, i32) {
    %c0_i32 = arith.constant 0 : i32
    return %arg0, %arg1, %arg2 : i32, i32, i32
  }
}

</mosaic_0001>

<llo_original>
// kernel: tpu_custom_call.1
$region0: #{tpu_custom_call.1}
  #allocation0 [shape = 'u32[]', space=smem, size = 0x4, offset = 0x4, fixed_abs, tag = 'smem constant byte address 0x4 - core index']
  #allocation1 [shape = 'u32[144,128]{1,0:T(1,128)}', space=vmem, size = 0x12000, scoped, tag = 'internal scratch']
  %s0 = inlined_call_operand.hbm [shape: f32[2,16,32], index: 0, kind: input, shape index: {}]
  %s1 = inlined_call_operand.hbm [shape: bf16[32,32], index: 1, kind: input, shape index: {}]
  %s2 = inlined_call_operand.vmem [shape: f32[1,32], index: 2, kind: input, shape index: {}]
  %s3 = inlined_call_operand.hbm [shape: bf16[2,16,32], index: 3, kind: output, shape index: {}]
  %s4 = sld [smem:[#allocation0]]
  $region53: #{tpu_custom_call.1} parent=0
    _
  %s6 = ssub.s32 1, %s4
  %s7 = scalar_select 0, %s6, %s4
  $region1: #{tpu_custom_call.1} parent=0
    #allocation2 [shape = 'u8[8192]{0}', space=vmem, size = 0x2000, scoped, tag = 'input window, operand 0']
    #allocation3 [shape = 's32[2]{0}', space=sflag, size = 0x8, scoped, tag = 'scoped memory for tpu_custom_call.1']
    #allocation4 [shape = 's32[2]{0}', space=sflag, size = 0x8, scoped, tag = 'scoped memory for tpu_custom_call.1']
    #allocation5 [shape = 'u8[8192]{0}', space=vmem, size = 0x2000, scoped, tag = 'input window, operand 1, single buffered']
    #allocation6 [shape = 's32[1]{0}', space=sflag, size = 0x4, scoped, tag = 'scoped memory for tpu_custom_call.1']
    #allocation7 [shape = 'u8[4096]{0}', space=vmem, size = 0x1000, scoped, tag = 'output window, operand 0']
    %8 = vsyncpa [#allocation3], 0
    %s9 = scalar_lea.sflag [#allocation3], 1
    %10 = vsyncpa %s9, 0
    %11 = vsyncpa [#allocation6], 0
    %12 = vsyncpa [#allocation4], 0
    %s13 = scalar_lea.sflag [#allocation4], 1
    %14 = vsyncpa %s13, 0
    loop: start=0, step=1, limit=6
    $region2: #{tpu_custom_call.1} parent=1 // loop_pre_header
      _
    $region3: #{tpu_custom_call.1} parent=1 // loop_header
      %s16 = sphi 0, %s20
      %p17 = scmp.ge.s32.totalorder %s16, 6
      %s23 = sphi 0, %s42
      %s24 = sphi 0, %s38
      %s25 = sphi 0, %s34
      %s26 = sphi 0, %s23
      %s27 = sphi 0, %s24
      %s28 = sphi 0, %s25
      %s29 = sphi 0, %s26
      %s30 = sphi 0, %s27
      %s31 = sphi 0, %s28
      %s47 = sphi 0, %s49
      %s50 = sphi 0, %s47
      %s51 = sphi 0, %s50
      %s67 = sphi 0, %s51
      %s71 = sphi 0, %s71
      %s73 = sphi 0, %s71
      %s74 = sphi 0, %s73
      %s88 = sphi 0, %s74
      %s92 = sphi 0, %s92
      %s94 = sphi 0, %s92
      %s95 = sphi 0, %s94
      %s109 = sphi 0, %s95
      %s119 = sphi 0, %s121
      %s122 = sphi 0, %s119
      %s123 = sphi 0, %s122
      %s139 = sphi 0, %s123
    $region4: #{tpu_custom_call.1} parent=1 // loop_header_branch
      %19 = sbr.rel (%p17) target = $region8
    $region5: #{tpu_custom_call.1} parent=1 // loop_body
      %s21 = ssub.s32 %s16, 1
      %s22 = ssub.s32 %s16, 2
      %s32 = sadd.s32 1, %s25
      %p33 = scmp.ge.s32.totalorder %s32, 1
      %s34 = scalar_select %p33, 0, %s32
      %s35 = sadd.s32 1, %s24
      %s36 = scalar_select %p33, %s35, %s24
      %p37 = scmp.ge.s32.totalorder %s36, 2
      %s38 = scalar_select %p37, 0, %s36
      %s39 = sadd.s32 1, %s23
      %s40 = scalar_select %p37, %s39, %s23
      %p41 = scmp.ge.s32.totalorder %s40, 2
      %s42 = scalar_select %p41, 0, %s40
      %s43 = ssub.s32 %s23, %s42
      %s44 = ssub.s32 %s24, %s38
      %s45 = sor.u32 %s43, %s44
      %p46 = scmp.eq.s32.totalorder %s45, 0
      %s48 = sadd.s32 %s47, 1
      %s49 = scalar_select %p46, %s47, %s48
      %p52 = pneg %p46
      %p53 = scmp.eq.s32.totalorder %s16, 3
      %p54 = por %p52, %p53
      %p55 = scmp.ne.s32.totalorder %s47, %s50
      %p56 = scmp.eq.s32.totalorder %s16, 0
      %p57 = por %p55, %p56
      %p58 = scmp.ne.s32.totalorder %s47, %s50
      %p59 = scmp.eq.s32.totalorder %s21, 3
      %p60 = por %p58, %p59
      %p61 = scmp.ne.s32.totalorder %s50, %s51
      %p62 = scmp.eq.s32.totalorder %s21, 0
      %p63 = por %p61, %p62
      %p64 = scmp.ne.s32.totalorder %s50, %s51
      %p65 = scmp.eq.s32.totalorder %s22, 3
      %p66 = por %p64, %p65
      %p68 = scmp.ne.s32.totalorder %s51, %s67
      %p69 = scmp.eq.s32.totalorder %s22, 0
      %p70 = por %p68, %p69
      %s72 = sadd.s32 %s71, 1
      %p75 = scmp.eq.s32.totalorder %s16, 3
      %p76 = scmp.ne.s32.totalorder %s71, %s73
      %p77 = scmp.eq.s32.totalorder %s16, 0
      %p78 = por %p76, %p77
      %p79 = scmp.ne.s32.totalorder %s71, %s73
      %p80 = scmp.eq.s32.totalorder %s21, 3
      %p81 = por %p79, %p80
      %p82 = scmp.ne.s32.totalorder %s73, %s74
      %p83 = scmp.eq.s32.totalorder %s21, 0
      %p84 = por %p82, %p83
      %p85 = scmp.ne.s32.totalorder %s73, %s74
      %p86 = scmp.eq.s32.totalorder %s22, 3
      %p87 = por %p85, %p86
      %p89 = scmp.ne.s32.totalorder %s74, %s88
      %p90 = scmp.eq.s32.totalorder %s22, 0
      %p91 = por %p89, %p90
      %s93 = sadd.s32 %s92, 1
      %p96 = scmp.eq.s32.totalorder %s16, 3
      %p97 = scmp.ne.s32.totalorder %s92, %s94
      %p98 = scmp.eq.s32.totalorder %s16, 0
      %p99 = por %p97, %p98
      %p100 = scmp.ne.s32.totalorder %s92, %s94
      %p101 = scmp.eq.s32.totalorder %s21, 3
      %p102 = por %p100, %p101
      %p103 = scmp.ne.s32.totalorder %s94, %s95
      %p104 = scmp.eq.s32.totalorder %s21, 0
      %p105 = por %p103, %p104
      %p106 = scmp.ne.s32.totalorder %s94, %s95
      %p107 = scmp.eq.s32.totalorder %s22, 3
      %p108 = por %p106, %p107
      %p110 = scmp.ne.s32.totalorder %s95, %s109
      %p111 = scmp.eq.s32.totalorder %s22, 0
      %p112 = por %p110, %p111
      %s113 = ssub.s32 %s23, %s42
      %s114 = ssub.s32 %s24, %s38
      %s115 = sor.u32 %s113, %s114
      %s116 = ssub.s32 %s25, %s34
      %s117 = sor.u32 %s115, %s116
      %p118 = scmp.eq.s32.totalorder %s117, 0
      %s120 = sadd.s32 %s119, 1
      %s121 = scalar_select %p118, %s119, %s120
      %p124 = pneg %p118
      %p125 = scmp.eq.s32.totalorder %s16, 3
      %p126 = por %p124, %p125
      %p127 = scmp.ne.s32.totalorder %s119, %s122
      %p128 = scmp.eq.s32.totalorder %s16, 0
      %p129 = por %p127, %p128
      %p130 = scmp.ne.s32.totalorder %s119, %s122
      %p131 = scmp.eq.s32.totalorder %s21, 3
      %p132 = por %p130, %p131
      %p133 = scmp.ne.s32.totalorder %s122, %s123
      %p134 = scmp.eq.s32.totalorder %s21, 0
      %p135 = por %p133, %p134
      %p136 = scmp.ne.s32.totalorder %s122, %s123
      %p137 = scmp.eq.s32.totalorder %s22, 3
      %p138 = por %p136, %p137
      %p140 = scmp.ne.s32.totalorder %s123, %s139
      %p141 = scmp.eq.s32.totalorder %s22, 0
      %p142 = por %p140, %p141
      %p143 = scmp.le.s32.totalorder 1, %s16
      %p144 = scmp.lt.s32.totalorder %s16, 5
      %p145 = pnand %p143, %p144
      %p146 = pneg %p145
      // Predicated region
      $region9: #{tpu_custom_call.1} parent=5 // pred_check
        _
      $region10: #{tpu_custom_call.1} parent=5 // pred_check_branch
        %148 = sbr.rel (%p145) target = $region12
      $region11: #{tpu_custom_call.1} parent=5 // pred_region
        %s149 = ssub.s32 %s16, 1
        // Predicated region
        $region13: #{tpu_custom_call.1} parent=11 // pred_check
          %p150 = pneg %p84
        $region14: #{tpu_custom_call.1} parent=11 // pred_check_branch
          %152 = sbr.rel (%p150) target = $region16
        $region15: #{tpu_custom_call.1} parent=11 // pred_region
          %s154 = ssub.s32 256, 256
          %155 = vsyncadd [#allocation6], %s154
          %s156 = sshll.u32 [#allocation5], 4
          %s157 = int_to_ptr.vmem [resolvable:$true] %s156
          %162 = dma.hbm_to_vmem [thread:$0]  %s1, 256, %s157, [#allocation6], 64, 64, 4
        $region16: #{tpu_custom_call.1} parent=11 // pred_fallthru
          _
        // Predicated region
        $region17: #{tpu_custom_call.1} parent=11 // pred_check
          %p163 = pneg %p105
        $region18: #{tpu_custom_call.1} parent=11 // pred_check_branch
          %165 = sbr.rel (%p163) target = $region20
        $region19: #{tpu_custom_call.1} parent=11 // pred_region
          _
        $region20: #{tpu_custom_call.1} parent=11 // pred_fallthru
          _
      $region12: #{tpu_custom_call.1} parent=5 // pred_fallthru
        _
      %p166 = scmp.lt.s32.totalorder %s16, 4
      // Predicated region
      $region21: #{tpu_custom_call.1} parent=5 // pred_check
        %p167 = pneg %p166
      $region22: #{tpu_custom_call.1} parent=5 // pred_check_branch
        %169 = sbr.rel (%p167) target = $region24
      $region23: #{tpu_custom_call.1} parent=5 // pred_region
        // Predicated region
        $region25: #{tpu_custom_call.1} parent=23 // pred_check
          %p170 = pneg %p57
        $region26: #{tpu_custom_call.1} parent=23 // pred_check_branch
          %172 = sbr.rel (%p170) target = $region28
        $region27: #{tpu_custom_call.1} parent=23 // pred_region
          %s173 = sand.u32 %s47, 1
          %s174 = scalar_lea.sflag [#allocation3], %s173
          %s175 = sand.u32 %s47, 1
          %s176 = smul.addr %s175, 8
          %s177 = scalar_lea.vmem [#allocation2], %s176
          %s179 = ssub.s32 128, 128
          %180 = vsyncadd %s174, %s179
          %s181 = smul.addr %s23, 2
          %s182 = sadd.s32 %s24, %s181
          %s183 = smul.addr %s182, 128
          %s184 = scalar_lea.hbm %s0, %s183
          %s186 = sshll.u32 %s177, 4
          %s187 = int_to_ptr.vmem [resolvable:$true] %s186
          %189 = dma.hbm_to_vmem [thread:$0]  %s184, 128, %s187, %s174
        $region28: #{tpu_custom_call.1} parent=23 // pred_fallthru
          _
      $region24: #{tpu_custom_call.1} parent=5 // pred_fallthru
        _
      %p190 = scmp.le.s32.totalorder 1, %s16
      %p191 = scmp.lt.s32.totalorder %s16, 5
      %p192 = pnand %p190, %p191
      %p193 = pneg %p192
      // Predicated region
      $region29: #{tpu_custom_call.1} parent=5 // pred_check
        _
      $region30: #{tpu_custom_call.1} parent=5 // pred_check_branch
        %195 = sbr.rel (%p192) target = $region32
      $region31: #{tpu_custom_call.1} parent=5 // pred_region
        %s196 = ssub.s32 %s16, 1
        %s197 = sand.u32 %s50, 1
        %s198 = scalar_lea.sflag [#allocation3], %s197
        %s199 = sand.u32 %s50, 1
        %s200 = smul.addr %s199, 8
        %s201 = scalar_lea.vmem [#allocation2], %s200
        // Predicated region
        $region33: #{tpu_custom_call.1} parent=31 // pred_check
          %p202 = pneg %p63
        $region34: #{tpu_custom_call.1} parent=31 // pred_check_branch
          %204 = sbr.rel (%p202) target = $region36
        $region35: #{tpu_custom_call.1} parent=31 // pred_region
          %205 = dma.done %s198, 128
        $region36: #{tpu_custom_call.1} parent=31 // pred_fallthru
          _
        // Predicated region
        $region37: #{tpu_custom_call.1} parent=31 // pred_check
          %p206 = pneg %p84
        $region38: #{tpu_custom_call.1} parent=31 // pred_check_branch
          %208 = sbr.rel (%p206) target = $region40
        $region39: #{tpu_custom_call.1} parent=31 // pred_region
          %209 = dma.done [#allocation6], 256
        $region40: #{tpu_custom_call.1} parent=31 // pred_fallthru
          _
        %s210 = sand.u32 %s50, 1
        %s211 = scalar_lea.sflag [#allocation3], %s210
        %s212 = sand.u32 %s50, 1
        %s213 = smul.addr %s212, 8
        %s214 = scalar_lea.vmem [#allocation2], %s213
        %p215 = pneg %p63
        %p216 = pneg %p60
        %p217 = pneg %p84
        %p218 = pneg %p81
        %p219 = pneg %p105
        %p220 = pneg %p102
        %p221 = pneg %p135
        %p222 = pneg %p132
        %s223 = sand.u32 %s122, 1
        %s224 = scalar_lea.sflag [#allocation4], %s223
        %s225 = sand.u32 %s122, 1
        %s226 = smul.addr %s225, 4
        %s227 = scalar_lea.vmem [#allocation7], %s226
        %v229 = vld [vmem:[%s201] sm:$0xff]
        %v230 = vpack.c.bf16 %v229, %v229
        %v231 = vld [vmem:[#allocation5] sm:$0xf]
        %v232 = vld [vmem:[#allocation5 + $0x4] sm:$0xf]
        %v233 = vld [vmem:[#allocation5 + $0x8] sm:$0xf]
        %v234 = vld [vmem:[#allocation5 + $0xc] sm:$0xf]
        %v235 = vld [vmem:[%s2] sm:$0x1]
        %v237 = vlaneseq
        %v238 = vshrl.u32 %v237, 7
        %v239 = vsub.s32 0, %v238
        %v240 = vrot.slane %v235, %v239
        %v246 = vunpack.c.l.b16 %v231
        %v247 = vunpack.c.l.b16 %v232
        %v248 = vunpack.c.l.b16 %v233
        %v249 = vunpack.c.l.b16 %v234
        %v250 = vpack.c.b16 %v247, %v246
        %v251 = vpack.c.b16 %v249, %v248
        %vm254 = vcmask 261120
        %v256 = vsel %vm254, %v230, 0
        %258 = vmatprep.subr.bf16.mxu0 0
        %259 = vmatpush1.bf16.msra.mxu0 0
        %260 = vmatprep.subr.bf16.mxu0 0
        %261 = vmatpush1.bf16.msra.mxu0 0
        %262 = vmatprep.subr.bf16.mxu0 0
        %263 = vmatpush1.bf16.msra.mxu0 0
        %264 = vmatprep.subr.bf16.mxu0 0
        %265 = vmatpush1.bf16.msra.mxu0 0
        %266 = vmatprep.subr.bf16.mxu0 0
        %267 = vmatpush1.bf16.msra.mxu0 0
        %268 = vmatprep.subr.bf16.mxu0 0
        %269 = vmatpush1.bf16.msra.mxu0 0
        %270 = vmatprep.subr.bf16.mxu0 0
        %271 = vmatpush1.bf16.msra.mxu0 %v251
        %272 = vmatprep.subr.bf16.mxu0 0
        %273 = vmatpush1.bf16.msra.mxu0 %v250
        %274 = vmatprep.subr.bf16.mxu0 0
        %275 = vmatpush2.bf16.msra.mxu0 0
        %276 = vmatprep.subr.bf16.mxu0 0
        %277 = vmatpush2.bf16.msra.mxu0 0
        %278 = vmatprep.subr.bf16.mxu0 0
        %279 = vmatpush2.bf16.msra.mxu0 0
        %280 = vmatprep.subr.bf16.mxu0 0
        %281 = vmatpush2.bf16.msra.mxu0 0
        %282 = vmatprep.subr.bf16.mxu0 0
        %283 = vmatpush2.bf16.msra.mxu0 0
        %284 = vmatprep.subr.bf16.mxu0 0
        %285 = vmatpush2.bf16.msra.mxu0 0
        %286 = vmatprep.subr.bf16.mxu0 0
        %287 = vmatpush2.bf16.msra.mxu0 0
        %288 = vmatprep.subr.bf16.mxu0 0
        %289 = vmatpush2.bf16.msra.mxu0 0
        %290 = vmatprep.mubr.bf16.mxu0 0
        %291 = vmatmul.mubr.bf16.gmra.mxu0 %v256
        %v292 = vpop.f32.mrf.mxu0
        %v293 = vadd.f32 %v240, %v292
        %v294 = vpop.f32.mrf.mxu0
        %v295 = vpop.f32.mrf.mxu0
        %v296 = vpop.f32.mrf.mxu0
        %297 = vdwg.mxu0
        %v298 = vpack.c.bf16 %v293, %v293
        %vm299 = vcmask 257024
        %300 = vst.msk [vmem:[%s227] sm:$0xf] %vm299, %v298
        %s301 = sand.u32 %s122, 1
        %s302 = scalar_lea.sflag [#allocation4], %s301
        %s303 = sand.u32 %s122, 1
        %s304 = smul.addr %s303, 4
        %s305 = scalar_lea.vmem [#allocation7], %s304
        // Predicated region
        $region41: #{tpu_custom_call.1} parent=31 // pred_check
          %p306 = pneg %p132
        $region42: #{tpu_custom_call.1} parent=31 // pred_check_branch
          %308 = sbr.rel (%p306) target = $region44
        $region43: #{tpu_custom_call.1} parent=31 // pred_region
          %s310 = ssub.s32 64, 64
          %311 = vsyncadd %s302, %s310
          %s312 = sadd.s32 %s28, %s27
          %s313 = smul.addr %s26, 2
          %s314 = sadd.s32 %s312, %s313
          %s315 = smul.addr %s314, 64
          %s316 = scalar_lea.hbm %s3, %s315
          %s318 = sshll.u32 %s305, 4
          %s319 = int_to_ptr.vmem [resolvable:$true] %s318
          %321 = dma.vmem_to_hbm [thread:$0]  %s319, 64, %s316, %s302
        $region44: #{tpu_custom_call.1} parent=31 // pred_fallthru
          _
      $region32: #{tpu_custom_call.1} parent=5 // pred_fallthru
        _
      %p322 = scmp.le.s32.totalorder 2, %s16
      // Predicated region
      $region45: #{tpu_custom_call.1} parent=5 // pred_check
        %p323 = pneg %p322
      $region46: #{tpu_custom_call.1} parent=5 // pred_check_branch
        %325 = sbr.rel (%p323) target = $region48
      $region47: #{tpu_custom_call.1} parent=5 // pred_region
        %s326 = ssub.s32 %s16, 2
        // Predicated region
        $region49: #{tpu_custom_call.1} parent=47 // pred_check
          %p327 = pneg %p138
        $region50: #{tpu_custom_call.1} parent=47 // pred_check_branch
          %329 = sbr.rel (%p327) target = $region52
        $region51: #{tpu_custom_call.1} parent=47 // pred_region
          %s330 = sand.u32 %s123, 1
          %s331 = scalar_lea.sflag [#allocation4], %s330
          %s332 = sand.u32 %s123, 1
          %s333 = smul.addr %s332, 4
          %s334 = scalar_lea.vmem [#allocation7], %s333
          %335 = dma.done %s331, 64
        $region52: #{tpu_custom_call.1} parent=47 // pred_fallthru
          _
      $region48: #{tpu_custom_call.1} parent=5 // pred_fallthru
        _
    $region6: #{tpu_custom_call.1} parent=1 // loop_footer
      %s20 = sadd.s32 1, %s16
    $region7: #{tpu_custom_call.1} parent=1 // loop_footer_branch
      %15 = sbr.rel target = $region3
    $region8: #{tpu_custom_call.1} parent=1 // loop_exit
      _
    %336 = vsyncpa [#allocation3], 1
    %s337 = scalar_lea.sflag [#allocation3], 1
    %338 = vsyncpa %s337, 1
    %339 = vsyncpa [#allocation6], 1
    %340 = vsyncpa [#allocation4], 1
    %s341 = scalar_lea.sflag [#allocation4], 1
    %342 = vsyncpa %s341, 1

</llo_original>
